<compile_context>
chip_gen: v5e
topology: v5e:2x2
jax: 0.10.0
libtpu: 0.0.40
codegen_flags: <defaults>
</compile_context>

<pallas_src>
import functools

import jax
import jax.numpy as jnp
from jax.experimental import pallas as pl
from jax.experimental.pallas import tpu as pltpu


LANE = 128  # all head dims (<=8*ncf=80) and stem channels are zero-padded to 128 lanes


# ----------------------------------------------------------------------------
# In-kernel math helpers.
# ----------------------------------------------------------------------------
def _gelu(x):
    # tanh-approximate GELU; tanh lowers to the EUP (free slot vs VALU-heavy erf
    # polynomial).  |err| vs PyTorch's exact-erf nn.GELU() is <~1e-3 (inference-OK).
    c = 0.7978845608028654  # sqrt(2/pi)
    return 0.5 * x * (1.0 + jnp.tanh(c * (x + 0.044715 * x * x * x)))


# ----------------------------------------------------------------------------
# Fused Pallas kernel.
#
# Grid = (batch_tiles, row_tiles).  Each step:
#   * stem matmul on a (TB*Pt, Kp) bf16 patch tile -> bias + ReLU -> partial pool
#     sum accumulated into pool_ref (TB, 128) f32 scratch.
#   * on the LAST row tile: pooled mean -> batched head on (TB, 128) rows ->
#     lane-dense sigmoid write.
#
# Zero-padding invariants (enforced by offline packing in init_params):
#   * every activation row lives in 128 lanes; unused lanes are exactly 0, and
#     GELU(0)=tanh(0)=ReLU(0)=0 keeps them 0 through the whole chain.
#   * weight slab slots: 0=wv[:16,:ncf] 1=w1[:ncf,:4ncf] 2=w2[:4ncf, ncf:2ncf]
#                        3=wf1[:2ncf,:8ncf] 4=wf2[:8ncf,:2ncf] 5=wc[:2ncf,:nc]
#   * bias slab rows:    0=bv 1=b1 2=b2(shifted to [ncf:2ncf]) 3=bf1 4=bf2 5=bc
#                        6=conv bias, 7=zero
#   * because w2/b2 write their result into columns [ncf:2ncf], `v + t` equals
#     torch.cat([vision_features, tabular_features], dim=1) zero-padded to 128.
# ----------------------------------------------------------------------------
def _fused_kernel(patch_ref, clin_ref, convw_ref, w_ref, b_ref, out_ref, pool_ref,
                  *, inv_p):
    f32 = jnp.float32
    r = pl.program_id(1)
    biases = b_ref[...]                                              # (8, 128)

    @pl.when(r == 0)
    def _():
        pool_ref[...] = jnp.zeros_like(pool_ref)

    # Vision stem tile: conv(7x7,s2)-as-matmul (bf16 MXU, f32 acc) + bias + ReLU,
    # then a partial global-average-pool sum accumulated across row tiles.
    tb, pt, kp = patch_ref.shape
    h = jnp.dot(patch_ref[...].reshape(tb * pt, kp), convw_ref[...],
                preferred_element_type=f32)                          # (TB*Pt, 128)
    h = jnp.maximum(h + biases[6:7, :], 0.0)
    pool_ref[...] += h.reshape(tb, pt, LANE).sum(axis=1)             # (TB, 128)

    # Head: once per batch tile, on the last row tile, batched over TB rows.
    @pl.when(r == pl.num_programs(1) - 1)
    def _():
        pooled = pool_ref[...] * inv_p                               # (TB, 128)

        # DenseNet classifier-head stand-in: Linear(stem_C -> ncf), cols [:ncf].
        v = jnp.dot(pooled, w_ref[0], preferred_element_type=f32) + biases[0:1, :]

        # Clinical branch: MLPBlock(ncf -> 4ncf -> ncf) [Linear, GELU, Linear] + Tanh.
        clin = clin_ref[...]                                         # (TB, 128)
        h1 = _gelu(jnp.dot(clin, w_ref[1], preferred_element_type=f32)
                   + biases[1:2, :])
        t = jnp.tanh(jnp.dot(h1, w_ref[2], preferred_element_type=f32)
                     + biases[2:3, :])

        # Fusion MLPBlock(2ncf -> 8ncf -> 2ncf); `v + t` == concat([v, t]) padded.
        fused = v + t
        f = _gelu(jnp.dot(fused, w_ref[3], preferred_element_type=f32)
                  + biases[3:4, :])
        x = jnp.dot(f, w_ref[4], preferred_element_type=f32) + biases[4:5, :]

        # Classifier: Linear + Sigmoid; full lane-dense write (wrapper slices :nc).
        logits = jnp.dot(x, w_ref[5], preferred_element_type=f32) + biases[5:6, :]
        out_ref[...] = jax.nn.sigmoid(logits)


# ----------------------------------------------------------------------------
# Wrapper glue: im2col patch extraction + pallas_call plumbing.
# ----------------------------------------------------------------------------
def _extract_patches(x_nhwc, kh, kw, stride, pad):
    B, H, W, C = x_nhwc.shape
    xp = jnp.pad(x_nhwc, ((0, 0), (pad, pad), (pad, pad), (0, 0)))
    Ho = (H + 2 * pad - kh) // stride + 1
    Wo = (W + 2 * pad - kw) // stride + 1
    cols = []
    for i in range(kh):
        for j in range(kw):
            cols.append(xp[:, i:i + (Ho - 1) * stride + 1:stride,
                              j:j + (Wo - 1) * stride + 1:stride, :])
    patches = jnp.stack(cols, axis=3)           # (B, Ho, Wo, kh*kw, C)
    return patches.reshape(B, Ho * Wo, kh * kw * C)


def _pick_row_tile(P, cap=512):
    for t in range(min(P, cap), 7, -1):
        if P % t == 0 and t % 8 == 0:
            return t
    return P   # full extent (always a legal block dim)


def dense_mlp_net_forward(clinical_info, img_nchw, params, *, row_tile=None):
    """Multimodal DenseMLPNet.forward(clinical_info, img)."""
    x = jnp.transpose(img_nchw, (0, 2, 3, 1)).astype(jnp.float32)   # NCHW -> NHWC
    patches = _extract_patches(x, kh=7, kw=7, stride=2, pad=3)      # (B, P, K)
    B, P, K = patches.shape
    Kp = params["conv_w"].shape[0]
    patches = jnp.pad(patches, ((0, 0), (0, 0), (0, Kp - K))).astype(jnp.bfloat16)

    ncf, nc = params["ncf"], params["num_classes"]
    clin = jnp.zeros((B, LANE), jnp.float32)
    clin = clin.at[:, :ncf].set(clinical_info.astype(jnp.float32))

    TB = min(B, 8)                       # batch tile: fill sublanes, amortise weights
    assert B % TB == 0
    NT = B // TB
    Pt = row_tile if row_tile is not None else _pick_row_tile(P)
    assert P % Pt == 0 and (Pt % 8 == 0 or Pt == P)
    R = P // Pt

    conv_w, w_slab, b_slab = params["conv_w"], params["w_slab"], params["b_slab"]
    kernel = functools.partial(_fused_kernel, inv_p=1.0 / float(P))

    out = pl.pallas_call(
        kernel,
        out_shape=jax.ShapeDtypeStruct((B, LANE), jnp.float32),      # lane-dense
        grid=(NT, R),
        in_specs=[
            pl.BlockSpec((TB, Pt, Kp), lambda t, r: (t, r, 0)),      # patch row tile
            pl.BlockSpec((TB, LANE), lambda t, r: (t, 0)),           # clinical rows
            pl.BlockSpec(conv_w.shape, lambda t, r: (0, 0)),         # grid-invariant
            pl.BlockSpec(w_slab.shape, lambda t, r: (0, 0, 0)),
            pl.BlockSpec(b_slab.shape, lambda t, r: (0, 0)),
        ],
        out_specs=pl.BlockSpec((TB, LANE), lambda t, r: (t, 0)),
        scratch_shapes=[pltpu.VMEM((TB, LANE), jnp.float32)],        # running pool sum
        compiler_params=pltpu.CompilerParams(
            # batch-tile axis is parallel (feeds both v7x TCs when B > 8);
            # row-tile axis is the pool reduction -> arbitrary.
            dimension_semantics=("parallel", "arbitrary")),
    )(patches, clin, conv_w, w_slab, b_slab)
    return out[:, :nc]


# ----------------------------------------------------------------------------
# Pure-JAX reference (same packed parameters) for a correctness cross-check.
# ----------------------------------------------------------------------------
def _reference_forward(clinical_info, img_nchw, params):
    hi = jax.lax.Precision.HIGHEST
    x = jnp.transpose(img_nchw, (0, 2, 3, 1)).astype(jnp.float32)
    patches = _extract_patches(x, 7, 7, 2, 3)                        # (B, P, K)
    B, P, K = patches.shape
    Kp = params["conv_w"].shape[0]
    patches = jnp.pad(patches, ((0, 0), (0, 0), (0, Kp - K))).astype(jnp.bfloat16)
    W, b = params["w_slab"], params["b_slab"]
    h = jnp.einsum("bpk,kc->bpc", patches, params["conv_w"],
                   preferred_element_type=jnp.float32)
    h = jnp.maximum(h + b[6], 0.0)
    pooled = jnp.mean(h, axis=1)                                     # (B, 128)
    clin = jnp.zeros((B, LANE), jnp.float32)
    clin = clin.at[:, :params["ncf"]].set(clinical_info.astype(jnp.float32))
    v = jnp.dot(pooled, W[0], precision=hi) + b[0]
    h1 = _gelu(jnp.dot(clin, W[1], precision=hi) + b[1])
    t = jnp.tanh(jnp.dot(h1, W[2], precision=hi) + b[2])
    f = _gelu(jnp.dot(v + t, W[3], precision=hi) + b[3])
    xx = jnp.dot(f, W[4], precision=hi) + b[4]
    logits = jnp.dot(xx, W[5], precision=hi) + b[5]
    return jax.nn.sigmoid(logits[:, :params["num_classes"]])


# ----------------------------------------------------------------------------
# Deterministic parameter init: sample logical weights, then pack/pad them
# offline into the lane-padded slabs consumed by the kernel.
# ----------------------------------------------------------------------------
def init_params(key, in_channels=4, stem_channels=16,
                num_clinical_features=10, num_classes=1):
    ncf = num_clinical_features
    assert max(8 * ncf, stem_channels, num_classes) <= LANE
    K = 7 * 7 * in_channels
    Kp = ((K + LANE - 1) // LANE) * LANE        # 196 -> 256: aligned contraction dim
    keys = jax.random.split(key, 14)

    def w(k, shape, scale=0.1):
        return scale * jax.random.normal(k, shape, jnp.float32)

    conv_w = w(keys[0], (K, stem_channels)); conv_b = w(keys[1], (stem_channels,))
    wv = w(keys[2], (stem_channels, ncf));   bv = w(keys[3], (ncf,))
    w1 = w(keys[4], (ncf, 4 * ncf));         b1 = w(keys[5], (4 * ncf,))
    w2 = w(keys[6], (4 * ncf, ncf));         b2 = w(keys[7], (ncf,))
    wf1 = w(keys[8], (2 * ncf, 8 * ncf));    bf1 = w(keys[9], (8 * ncf,))
    wf2 = w(keys[10], (8 * ncf, 2 * ncf));   bf2 = w(keys[11], (2 * ncf,))
    wc = w(keys[12], (2 * ncf, num_classes)); bc = w(keys[13], (num_classes,))

    def place(mat, col_off=0):
        slab = jnp.zeros((LANE, LANE), jnp.float32)
        return slab.at[:mat.shape[0], col_off:col_off + mat.shape[1]].set(mat)

    # Slot 2 (w2) is column-shifted to [ncf:2ncf] so the clinical output lands in
    # the "tabular half" of the fused vector -> in-kernel concat is a plain add.
    w_slab = jnp.stack([place(wv), place(w1), place(w2, col_off=ncf),
                        place(wf1), place(wf2), place(wc)], axis=0)

    b_slab = jnp.zeros((8, LANE), jnp.float32)
    b_slab = b_slab.at[0, :ncf].set(bv)
    b_slab = b_slab.at[1, :4 * ncf].set(b1)
    b_slab = b_slab.at[2, ncf:2 * ncf].set(b2)
    b_slab = b_slab.at[3, :8 * ncf].set(bf1)
    b_slab = b_slab.at[4, :2 * ncf].set(bf2)
    b_slab = b_slab.at[5, :num_classes].set(bc)
    b_slab = b_slab.at[6, :stem_channels].set(conv_b)

    conv_w_pad = jnp.zeros((Kp, LANE), jnp.float32).at[:K, :stem_channels].set(conv_w)

    return {"conv_w": conv_w_pad.astype(jnp.bfloat16),   # bf16-native MXU stem
            "w_slab": w_slab, "b_slab": b_slab,
            "ncf": ncf, "num_classes": num_classes}


if __name__ == "__main__":
    key = jax.random.PRNGKey(0)
    k_clin, k_img, k_param = jax.random.split(key, 3)

    B, C, H, W = 2, 4, 16, 16
    ncf = 10

    clinical_info = jax.random.normal(k_clin, (B, ncf), jnp.float32)
    img = jax.random.normal(k_img, (B, C, H, W), jnp.float32)  # NCHW, like PyTorch

    params = init_params(k_param, in_channels=C, stem_channels=16,
                         num_clinical_features=ncf, num_classes=1)

    # row_tile=32 -> P=64 splits into 2 spatial tiles, exercising the accumulating
    # pool + pl.when init/finalise path that bounds VMEM at real image sizes.
    fwd = jax.jit(functools.partial(dense_mlp_net_forward, params=params,
                                    row_tile=32))
    out = jax.block_until_ready(fwd(clinical_info, img))

    assert out.shape == (B, 1) and out.dtype == jnp.float32
    assert bool(jnp.all((out >= 0.0) & (out <= 1.0)))          # sigmoid range

    # Cross-check against the pure-JAX reference.  Both paths use bf16 stem
    # operands with f32 accumulation and the same packed weights, so remaining
    # differences are MXU-vs-XLA accumulation order only.
    ref = _reference_forward(clinical_info, img, params)
    err = float(jnp.max(jnp.abs(out - ref)))
    assert err < 1e-3, err

    print("KERNEL_OK")
</pallas_src>

<mosaic_0001>
module attributes {stable_mosaic.version = 11 : i64} {
  func.func @_fused_kernel(%arg0: i32, %arg1: i32, %arg2: memref<2x32x256xbf16, #tpu.memory_space<vmem>>, %arg3: memref<2x128xf32, #tpu.memory_space<vmem>>, %arg4: memref<256x128xbf16, #tpu.memory_space<vmem>>, %arg5: memref<6x128x128xf32, #tpu.memory_space<vmem>>, %arg6: memref<8x128xf32, #tpu.memory_space<vmem>>, %arg7: memref<2x128xf32, #tpu.memory_space<vmem>>, %arg8: memref<2x128xf32, #tpu.memory_space<vmem>>) attributes {dimension_semantics = [#tpu.dimension_semantics<parallel>, #tpu.dimension_semantics<arbitrary>], iteration_bounds = array<i64: 1, 2>, scalar_prefetch = 0 : i64, scratch_operands = 1 : i64, tpu.core_type = #tpu.core_type<tc>, window_params = [{transform_indices = @transform_0, window_bounds = array<i64: 2, 32, 256>}, {transform_indices = @transform_1, window_bounds = array<i64: 2, 128>}, {pipeline_mode = #tpu.pipeline_mode<synchronous>, transform_indices = @transform_2, window_bounds = array<i64: 256, 128>}, {pipeline_mode = #tpu.pipeline_mode<synchronous>, transform_indices = @transform_3, window_bounds = array<i64: 6, 128, 128>}, {pipeline_mode = #tpu.pipeline_mode<synchronous>, transform_indices = @transform_4, window_bounds = array<i64: 8, 128>}, {transform_indices = @transform_5, window_bounds = array<i64: 2, 128>}]} {
    %c0 = arith.constant 0 : index
    %c0_0 = arith.constant 0 : index
    %0 = vector.load %arg6[%c0, %c0_0] : memref<8x128xf32, #tpu.memory_space<vmem>>, vector<8x128xf32>
    %c0_i32 = arith.constant 0 : i32
    %1 = arith.cmpi eq, %arg1, %c0_i32 : i32
    %2 = arith.extui %1 : i1 to i32
    %c0_i32_1 = arith.constant 0 : i32
    %3 = arith.cmpi ne, %2, %c0_i32_1 : i32
    scf.if %3 {
      %cst_14 = arith.constant 0.000000e+00 : f32
      %21 = vector.broadcast %cst_14 : f32 to vector<2x128xf32>
      %c0_15 = arith.constant 0 : index
      %c0_16 = arith.constant 0 : index
      %22 = vector.load %arg8[%c0_15, %c0_16] : memref<2x128xf32, #tpu.memory_space<vmem>>, vector<2x128xf32>
      tpu.vector_store %arg8[%c0_15, %c0_16], %21 {strides = array<i32>} : memref<2x128xf32, #tpu.memory_space<vmem>>, vector<2x128xf32>,
    } else {
    }
    %c0_2 = arith.constant 0 : index
    %c0_3 = arith.constant 0 : index
    %c0_4 = arith.constant 0 : index
    %4 = vector.load %arg2[%c0_2, %c0_3, %c0_4] : memref<2x32x256xbf16, #tpu.memory_space<vmem>>, vector<2x32x256xbf16>
    %5 = vector.shape_cast %4 : vector<2x32x256xbf16> to vector<64x256xbf16>
    %c0_5 = arith.constant 0 : index
    %c0_6 = arith.constant 0 : index
    %6 = vector.load %arg4[%c0_5, %c0_6] : memref<256x128xbf16, #tpu.memory_space<vmem>>, vector<256x128xbf16>
    %cst = arith.constant dense<0.000000e+00> : vector<64x128xf32>
    %7 = tpu.matmul %5, %6, %cst {dimension_numbers = #tpu.dot_dimension_numbers<[1], [0], [0], [1], [0, 0, 1, 1], [], []>} : vector<64x256xbf16>, vector<256x128xbf16>, vector<64x128xf32> -> vector<64x128xf32>
    %8 = vector.extract_strided_slice %0 {offsets = [6, 0], sizes = [1, 128], strides = [1, 1]} : vector<8x128xf32> to vector<1x128xf32>
    %9 = vector.broadcast %8 : vector<1x128xf32> to vector<64x128xf32>
    %10 = arith.addf %7, %9 : vector<64x128xf32>
    %cst_7 = arith.constant 0.000000e+00 : f32
    %11 = vector.broadcast %cst_7 : f32 to vector<64x128xf32>
    %12 = arith.maximumf %10, %11 : vector<64x128xf32>
    %c0_8 = arith.constant 0 : index
    %c0_9 = arith.constant 0 : index
    %13 = vector.load %arg8[%c0_8, %c0_9] : memref<2x128xf32, #tpu.memory_space<vmem>>, vector<2x128xf32>
    %14 = vector.shape_cast %12 : vector<64x128xf32> to vector<2x32x128xf32>
    %cst_10 = arith.constant dense<0.000000e+00> : vector<2x128xf32>
    %15 = vector.multi_reduction <add>, %14, %cst_10 [1] : vector<2x32x128xf32> to vector<2x128xf32>
    %16 = arith.addf %13, %15 : vector<2x128xf32>
    %c0_11 = arith.constant 0 : index
    %c0_12 = arith.constant 0 : index
    %17 = vector.load %arg8[%c0_11, %c0_12] : memref<2x128xf32, #tpu.memory_space<vmem>>, vector<2x128xf32>
    tpu.vector_store %arg8[%c0_11, %c0_12], %16 {strides = array<i32>} : memref<2x128xf32, #tpu.memory_space<vmem>>, vector<2x128xf32>,
    %c1_i32 = arith.constant 1 : i32
    %18 = arith.cmpi eq, %arg1, %c1_i32 : i32
    %19 = arith.extui %18 : i1 to i32
    %c0_i32_13 = arith.constant 0 : i32
    %20 = arith.cmpi ne, %19, %c0_i32_13 : i32
    scf.if %20 {
      %c0_14 = arith.constant 0 : index
      %c0_15 = arith.constant 0 : index
      %21 = vector.load %arg8[%c0_14, %c0_15] : memref<2x128xf32, #tpu.memory_space<vmem>>, vector<2x128xf32>
      %cst_16 = arith.constant 1.562500e-02 : f32
      %22 = vector.broadcast %cst_16 : f32 to vector<2x128xf32>
      %23 = arith.mulf %21, %22 : vector<2x128xf32>
      %c0_17 = arith.constant 0 : index
      %c0_18 = arith.constant 0 : index
      %c0_19 = arith.constant 0 : index
      %24 = vector.load %arg5[%c0_17, %c0_18, %c0_19] : memref<6x128x128xf32, #tpu.memory_space<vmem>>, vector<1x128x128xf32>
      %25 = vector.shape_cast %24 : vector<1x128x128xf32> to vector<128x128xf32>
      %cst_20 = arith.constant dense<0.000000e+00> : vector<2x128xf32>
      %26 = tpu.matmul %23, %25, %cst_20 {dimension_numbers = #tpu.dot_dimension_numbers<[1], [0], [0], [1], [0, 0, 1, 1], [], []>} : vector<2x128xf32>, vector<128x128xf32>, vector<2x128xf32> -> vector<2x128xf32>
      %27 = vector.extract_strided_slice %0 {offsets = [0, 0], sizes = [1, 128], strides = [1, 1]} : vector<8x128xf32> to vector<1x128xf32>
      %28 = vector.broadcast %27 : vector<1x128xf32> to vector<2x128xf32>
      %29 = arith.addf %26, %28 : vector<2x128xf32>
      %c0_21 = arith.constant 0 : index
      %c0_22 = arith.constant 0 : index
      %30 = vector.load %arg3[%c0_21, %c0_22] : memref<2x128xf32, #tpu.memory_space<vmem>>, vector<2x128xf32>
      %c1 = arith.constant 1 : index
      %c0_23 = arith.constant 0 : index
      %c0_24 = arith.constant 0 : index
      %31 = vector.load %arg5[%c1, %c0_23, %c0_24] : memref<6x128x128xf32, #tpu.memory_space<vmem>>, vector<1x128x128xf32>
      %32 = vector.shape_cast %31 : vector<1x128x128xf32> to vector<128x128xf32>
      %cst_25 = arith.constant dense<0.000000e+00> : vector<2x128xf32>
      %33 = tpu.matmul %30, %32, %cst_25 {dimension_numbers = #tpu.dot_dimension_numbers<[1], [0], [0], [1], [0, 0, 1, 1], [], []>} : vector<2x128xf32>, vector<128x128xf32>, vector<2x128xf32> -> vector<2x128xf32>
      %34 = vector.extract_strided_slice %0 {offsets = [1, 0], sizes = [1, 128], strides = [1, 1]} : vector<8x128xf32> to vector<1x128xf32>
      %35 = vector.broadcast %34 : vector<1x128xf32> to vector<2x128xf32>
      %36 = arith.addf %33, %35 : vector<2x128xf32>
      %cst_26 = arith.constant 5.000000e-01 : f32
      %37 = vector.broadcast %cst_26 : f32 to vector<2x128xf32>
      %38 = arith.mulf %37, %36 : vector<2x128xf32>
      %cst_27 = arith.constant 4.471500e-02 : f32
      %39 = vector.broadcast %cst_27 : f32 to vector<2x128xf32>
      %40 = arith.mulf %39, %36 : vector<2x128xf32>
      %41 = arith.mulf %40, %36 : vector<2x128xf32>
      %42 = arith.mulf %41, %36 : vector<2x128xf32>
      %43 = arith.addf %36, %42 : vector<2x128xf32>
      %cst_28 = arith.constant 0.797884583 : f32
      %44 = vector.broadcast %cst_28 : f32 to vector<2x128xf32>
      %45 = arith.mulf %44, %43 : vector<2x128xf32>
      %46 = math.tanh %45 : vector<2x128xf32>
      %cst_29 = arith.constant 1.000000e+00 : f32
      %47 = vector.broadcast %cst_29 : f32 to vector<2x128xf32>
      %48 = arith.addf %47, %46 : vector<2x128xf32>
      %49 = arith.mulf %38, %48 : vector<2x128xf32>
      %c2 = arith.constant 2 : index
      %c0_30 = arith.constant 0 : index
      %c0_31 = arith.constant 0 : index
      %50 = vector.load %arg5[%c2, %c0_30, %c0_31] : memref<6x128x128xf32, #tpu.memory_space<vmem>>, vector<1x128x128xf32>
      %51 = vector.shape_cast %50 : vector<1x128x128xf32> to vector<128x128xf32>
      %cst_32 = arith.constant dense<0.000000e+00> : vector<2x128xf32>
      %52 = tpu.matmul %49, %51, %cst_32 {dimension_numbers = #tpu.dot_dimension_numbers<[1], [0], [0], [1], [0, 0, 1, 1], [], []>} : vector<2x128xf32>, vector<128x128xf32>, vector<2x128xf32> -> vector<2x128xf32>
      %53 = vector.extract_strided_slice %0 {offsets = [2, 0], sizes = [1, 128], strides = [1, 1]} : vector<8x128xf32> to vector<1x128xf32>
      %54 = vector.broadcast %53 : vector<1x128xf32> to vector<2x128xf32>
      %55 = arith.addf %52, %54 : vector<2x128xf32>
      %56 = math.tanh %55 : vector<2x128xf32>
      %57 = arith.addf %29, %56 : vector<2x128xf32>
      %c3 = arith.constant 3 : index
      %c0_33 = arith.constant 0 : index
      %c0_34 = arith.constant 0 : index
      %58 = vector.load %arg5[%c3, %c0_33, %c0_34] : memref<6x128x128xf32, #tpu.memory_space<vmem>>, vector<1x128x128xf32>
      %59 = vector.shape_cast %58 : vector<1x128x128xf32> to vector<128x128xf32>
      %cst_35 = arith.constant dense<0.000000e+00> : vector<2x128xf32>
      %60 = tpu.matmul %57, %59, %cst_35 {dimension_numbers = #tpu.dot_dimension_numbers<[1], [0], [0], [1], [0, 0, 1, 1], [], []>} : vector<2x128xf32>, vector<128x128xf32>, vector<2x128xf32> -> vector<2x128xf32>
      %61 = vector.extract_strided_slice %0 {offsets = [3, 0], sizes = [1, 128], strides = [1, 1]} : vector<8x128xf32> to vector<1x128xf32>
      %62 = vector.broadcast %61 : vector<1x128xf32> to vector<2x128xf32>
      %63 = arith.addf %60, %62 : vector<2x128xf32>
      %cst_36 = arith.constant 5.000000e-01 : f32
      %64 = vector.broadcast %cst_36 : f32 to vector<2x128xf32>
      %65 = arith.mulf %64, %63 : vector<2x128xf32>
      %cst_37 = arith.constant 4.471500e-02 : f32
      %66 = vector.broadcast %cst_37 : f32 to vector<2x128xf32>
      %67 = arith.mulf %66, %63 : vector<2x128xf32>
      %68 = arith.mulf %67, %63 : vector<2x128xf32>
      %69 = arith.mulf %68, %63 : vector<2x128xf32>
      %70 = arith.addf %63, %69 : vector<2x128xf32>
      %cst_38 = arith.constant 0.797884583 : f32
      %71 = vector.broadcast %cst_38 : f32 to vector<2x128xf32>
      %72 = arith.mulf %71, %70 : vector<2x128xf32>
      %73 = math.tanh %72 : vector<2x128xf32>
      %cst_39 = arith.constant 1.000000e+00 : f32
      %74 = vector.broadcast %cst_39 : f32 to vector<2x128xf32>
      %75 = arith.addf %74, %73 : vector<2x128xf32>
      %76 = arith.mulf %65, %75 : vector<2x128xf32>
      %c4 = arith.constant 4 : index
      %c0_40 = arith.constant 0 : index
      %c0_41 = arith.constant 0 : index
      %77 = vector.load %arg5[%c4, %c0_40, %c0_41] : memref<6x128x128xf32, #tpu.memory_space<vmem>>, vector<1x128x128xf32>
      %78 = vector.shape_cast %77 : vector<1x128x128xf32> to vector<128x128xf32>
      %cst_42 = arith.constant dense<0.000000e+00> : vector<2x128xf32>
      %79 = tpu.matmul %76, %78, %cst_42 {dimension_numbers = #tpu.dot_dimension_numbers<[1], [0], [0], [1], [0, 0, 1, 1], [], []>} : vector<2x128xf32>, vector<128x128xf32>, vector<2x128xf32> -> vector<2x128xf32>
      %80 = vector.extract_strided_slice %0 {offsets = [4, 0], sizes = [1, 128], strides = [1, 1]} : vector<8x128xf32> to vector<1x128xf32>
      %81 = vector.broadcast %80 : vector<1x128xf32> to vector<2x128xf32>
      %82 = arith.addf %79, %81 : vector<2x128xf32>
      %c5 = arith.constant 5 : index
      %c0_43 = arith.constant 0 : index
      %c0_44 = arith.constant 0 : index
      %83 = vector.load %arg5[%c5, %c0_43, %c0_44] : memref<6x128x128xf32, #tpu.memory_space<vmem>>, vector<1x128x128xf32>
      %84 = vector.shape_cast %83 : vector<1x128x128xf32> to vector<128x128xf32>
      %cst_45 = arith.constant dense<0.000000e+00> : vector<2x128xf32>
      %85 = tpu.matmul %82, %84, %cst_45 {dimension_numbers = #tpu.dot_dimension_numbers<[1], [0], [0], [1], [0, 0, 1, 1], [], []>} : vector<2x128xf32>, vector<128x128xf32>, vector<2x128xf32> -> vector<2x128xf32>
      %86 = vector.extract_strided_slice %0 {offsets = [5, 0], sizes = [1, 128], strides = [1, 1]} : vector<8x128xf32> to vector<1x128xf32>
      %87 = vector.broadcast %86 : vector<1x128xf32> to vector<2x128xf32>
      %88 = arith.addf %85, %87 : vector<2x128xf32>
      %89 = arith.negf %88 : vector<2x128xf32>
      %90 = math.exp %89 : vector<2x128xf32>
      %cst_46 = arith.constant 1.000000e+00 : f32
      %91 = vector.broadcast %cst_46 : f32 to vector<2x128xf32>
      %92 = arith.addf %91, %90 : vector<2x128xf32>
      %93 = arith.divf %91, %92 : vector<2x128xf32>
      %c0_47 = arith.constant 0 : index
      %c0_48 = arith.constant 0 : index
      %94 = vector.load %arg7[%c0_47, %c0_48] : memref<2x128xf32, #tpu.memory_space<vmem>>, vector<2x128xf32>
      tpu.vector_store %arg7[%c0_47, %c0_48], %93 {strides = array<i32>} : memref<2x128xf32, #tpu.memory_space<vmem>>, vector<2x128xf32>,
    } else {
    }
    return
  }
  func.func @transform_0(%arg0: i32, %arg1: i32) -> (i32, i32, i32) {
    %c0_i32 = arith.constant 0 : i32
    %c0_i32_0 = arith.constant 0 : i32
    return %arg0, %arg1, %c0_i32 : i32, i32, i32
  }
  func.func @transform_1(%arg0: i32, %arg1: i32) -> (i32, i32) {
    %c0_i32 = arith.constant 0 : i32
    %c0_i32_0 = arith.constant 0 : i32
    return %arg0, %c0_i32 : i32, i32
  }
  func.func @transform_2(%arg0: i32, %arg1: i32) -> (i32, i32) {
    %c0_i32 = arith.constant 0 : i32
    %c0_i32_0 = arith.constant 0 : i32
    %c0_i32_1 = arith.constant 0 : i32
    return %c0_i32, %c0_i32_0 : i32, i32
  }
  func.func @transform_3(%arg0: i32, %arg1: i32) -> (i32, i32, i32) {
    %c0_i32 = arith.constant 0 : i32
    %c0_i32_0 = arith.constant 0 : i32
    %c0_i32_1 = arith.constant 0 : i32
    %c0_i32_2 = arith.constant 0 : i32
    return %c0_i32, %c0_i32_0, %c0_i32_1 : i32, i32, i32
  }
  func.func @transform_4(%arg0: i32, %arg1: i32) -> (i32, i32) {
    %c0_i32 = arith.constant 0 : i32
    %c0_i32_0 = arith.constant 0 : i32
    %c0_i32_1 = arith.constant 0 : i32
    return %c0_i32, %c0_i32_0 : i32, i32
  }
  func.func @transform_5(%arg0: i32, %arg1: i32) -> (i32, i32) {
    %c0_i32 = arith.constant 0 : i32
    %c0_i32_0 = arith.constant 0 : i32
    return %arg0, %c0_i32 : i32, i32
  }
}

</mosaic_0001>

<llo_original>
// kernel: dense_mlp_net_forward.1
$region0: #{dense_mlp_net_forward.1}
  #allocation0 [shape = 'u32[]', space=smem, size = 0x4, offset = 0x4, fixed_abs, tag = 'smem constant byte address 0x4 - core index']
  #allocation1 [shape = 'u32[72,128]{1,0:T(1,128)}', space=vmem, size = 0x9000, scoped, tag = 'internal scratch']
  #allocation2 [shape = 'f32[2,128]{1,0:T(2,128)}', space=vmem, size = 0x400, scoped, tag = 'scratch operand']
  %s0 = inlined_call_operand.vmem [shape: bf16[2,64,256], index: 0, kind: input, shape index: {}]
  %s1 = inlined_call_operand.vmem [shape: f32[2,128], index: 1, kind: input, shape index: {}]
  %s2 = inlined_call_operand.vmem [shape: bf16[256,128], index: 2, kind: input, shape index: {}]
  %s3 = inlined_call_operand.vmem [shape: f32[6,128,128], index: 3, kind: input, shape index: {}]
  %s4 = inlined_call_operand.vmem [shape: f32[8,128], index: 4, kind: input, shape index: {}]
  %s5 = inlined_call_operand.vmem [shape: f32[2,128], index: 5, kind: output, shape index: {}]
  %s6 = sld [smem:[#allocation0]]
  $region99: #{dense_mlp_net_forward.1} parent=0
    _
  %s8 = ssub.s32 1, %s6
  %s9 = scalar_select 0, %s8, %s6
  $region1: #{dense_mlp_net_forward.1} parent=0
    #allocation3 [shape = 'u8[65536]{0}', space=vmem, size = 0x10000, scoped, tag = 'input window, operand 0']
    loop: start=0, step=1, limit=4
    $region2: #{dense_mlp_net_forward.1} parent=1 // loop_pre_header
      _
    $region3: #{dense_mlp_net_forward.1} parent=1 // loop_header
      %s11 = sphi 0, %s15
      %p12 = scmp.ge.s32.totalorder %s11, 4
      %s18 = sphi 0, %s30
      %s19 = sphi 0, %s26
      %s20 = sphi 0, %s18
      %s21 = sphi 0, %s19
      %s22 = sphi 0, %s20
      %s23 = sphi 0, %s21
      %s35 = sphi 0, %s37
      %s38 = sphi 0, %s35
      %s39 = sphi 0, %s38
      %s55 = sphi 0, %s39
      %s61 = sphi 0, %s63
      %s64 = sphi 0, %s61
      %s65 = sphi 0, %s64
      %s81 = sphi 0, %s65
      %s85 = sphi 0, %s85
      %s87 = sphi 0, %s85
      %s88 = sphi 0, %s87
      %s102 = sphi 0, %s88
      %s106 = sphi 0, %s106
      %s108 = sphi 0, %s106
      %s109 = sphi 0, %s108
      %s123 = sphi 0, %s109
      %s127 = sphi 0, %s127
      %s129 = sphi 0, %s127
      %s130 = sphi 0, %s129
      %s144 = sphi 0, %s130
      %s150 = sphi 0, %s152
      %s153 = sphi 0, %s150
      %s154 = sphi 0, %s153
      %s170 = sphi 0, %s154
    $region4: #{dense_mlp_net_forward.1} parent=1 // loop_header_branch
      %14 = sbr.rel (%p12) target = $region8
    $region5: #{dense_mlp_net_forward.1} parent=1 // loop_body
      %s16 = ssub.s32 %s11, 1
      %s17 = ssub.s32 %s11, 2
      %s24 = sadd.s32 1, %s19
      %p25 = scmp.ge.s32.totalorder %s24, 2
      %s26 = scalar_select %p25, 0, %s24
      %s27 = sadd.s32 1, %s18
      %s28 = scalar_select %p25, %s27, %s18
      %p29 = scmp.ge.s32.totalorder %s28, 1
      %s30 = scalar_select %p29, 0, %s28
      %s31 = ssub.s32 %s18, %s30
      %s32 = ssub.s32 %s19, %s26
      %s33 = sor.u32 %s31, %s32
      %p34 = scmp.eq.s32.totalorder %s33, 0
      %s36 = sadd.s32 %s35, 1
      %s37 = scalar_select %p34, %s35, %s36
      %p40 = pneg %p34
      %p41 = scmp.eq.s32.totalorder %s11, 1
      %p42 = por %p40, %p41
      %p43 = scmp.ne.s32.totalorder %s35, %s38
      %p44 = scmp.eq.s32.totalorder %s11, 0
      %p45 = por %p43, %p44
      %p46 = scmp.ne.s32.totalorder %s35, %s38
      %p47 = scmp.eq.s32.totalorder %s16, 1
      %p48 = por %p46, %p47
      %p49 = scmp.ne.s32.totalorder %s38, %s39
      %p50 = scmp.eq.s32.totalorder %s16, 0
      %p51 = por %p49, %p50
      %p52 = scmp.ne.s32.totalorder %s38, %s39
      %p53 = scmp.eq.s32.totalorder %s17, 1
      %p54 = por %p52, %p53
      %p56 = scmp.ne.s32.totalorder %s39, %s55
      %p57 = scmp.eq.s32.totalorder %s17, 0
      %p58 = por %p56, %p57
      %s59 = ssub.s32 %s18, %s30
      %p60 = scmp.eq.s32.totalorder %s59, 0
      %s62 = sadd.s32 %s61, 1
      %s63 = scalar_select %p60, %s61, %s62
      %p66 = pneg %p60
      %p67 = scmp.eq.s32.totalorder %s11, 1
      %p68 = por %p66, %p67
      %p69 = scmp.ne.s32.totalorder %s61, %s64
      %p70 = scmp.eq.s32.totalorder %s11, 0
      %p71 = por %p69, %p70
      %p72 = scmp.ne.s32.totalorder %s61, %s64
      %p73 = scmp.eq.s32.totalorder %s16, 1
      %p74 = por %p72, %p73
      %p75 = scmp.ne.s32.totalorder %s64, %s65
      %p76 = scmp.eq.s32.totalorder %s16, 0
      %p77 = por %p75, %p76
      %p78 = scmp.ne.s32.totalorder %s64, %s65
      %p79 = scmp.eq.s32.totalorder %s17, 1
      %p80 = por %p78, %p79
      %p82 = scmp.ne.s32.totalorder %s65, %s81
      %p83 = scmp.eq.s32.totalorder %s17, 0
      %p84 = por %p82, %p83
      %s86 = sadd.s32 %s85, 1
      %p89 = scmp.eq.s32.totalorder %s11, 1
      %p90 = scmp.ne.s32.totalorder %s85, %s87
      %p91 = scmp.eq.s32.totalorder %s11, 0
      %p92 = por %p90, %p91
      %p93 = scmp.ne.s32.totalorder %s85, %s87
      %p94 = scmp.eq.s32.totalorder %s16, 1
      %p95 = por %p93, %p94
      %p96 = scmp.ne.s32.totalorder %s87, %s88
      %p97 = scmp.eq.s32.totalorder %s16, 0
      %p98 = por %p96, %p97
      %p99 = scmp.ne.s32.totalorder %s87, %s88
      %p100 = scmp.eq.s32.totalorder %s17, 1
      %p101 = por %p99, %p100
      %p103 = scmp.ne.s32.totalorder %s88, %s102
      %p104 = scmp.eq.s32.totalorder %s17, 0
      %p105 = por %p103, %p104
      %s107 = sadd.s32 %s106, 1
      %p110 = scmp.eq.s32.totalorder %s11, 1
      %p111 = scmp.ne.s32.totalorder %s106, %s108
      %p112 = scmp.eq.s32.totalorder %s11, 0
      %p113 = por %p111, %p112
      %p114 = scmp.ne.s32.totalorder %s106, %s108
      %p115 = scmp.eq.s32.totalorder %s16, 1
      %p116 = por %p114, %p115
      %p117 = scmp.ne.s32.totalorder %s108, %s109
      %p118 = scmp.eq.s32.totalorder %s16, 0
      %p119 = por %p117, %p118
      %p120 = scmp.ne.s32.totalorder %s108, %s109
      %p121 = scmp.eq.s32.totalorder %s17, 1
      %p122 = por %p120, %p121
      %p124 = scmp.ne.s32.totalorder %s109, %s123
      %p125 = scmp.eq.s32.totalorder %s17, 0
      %p126 = por %p124, %p125
      %s128 = sadd.s32 %s127, 1
      %p131 = scmp.eq.s32.totalorder %s11, 1
      %p132 = scmp.ne.s32.totalorder %s127, %s129
      %p133 = scmp.eq.s32.totalorder %s11, 0
      %p134 = por %p132, %p133
      %p135 = scmp.ne.s32.totalorder %s127, %s129
      %p136 = scmp.eq.s32.totalorder %s16, 1
      %p137 = por %p135, %p136
      %p138 = scmp.ne.s32.totalorder %s129, %s130
      %p139 = scmp.eq.s32.totalorder %s16, 0
      %p140 = por %p138, %p139
      %p141 = scmp.ne.s32.totalorder %s129, %s130
      %p142 = scmp.eq.s32.totalorder %s17, 1
      %p143 = por %p141, %p142
      %p145 = scmp.ne.s32.totalorder %s130, %s144
      %p146 = scmp.eq.s32.totalorder %s17, 0
      %p147 = por %p145, %p146
      %s148 = ssub.s32 %s18, %s30
      %p149 = scmp.eq.s32.totalorder %s148, 0
      %s151 = sadd.s32 %s150, 1
      %s152 = scalar_select %p149, %s150, %s151
      %p155 = pneg %p149
      %p156 = scmp.eq.s32.totalorder %s11, 1
      %p157 = por %p155, %p156
      %p158 = scmp.ne.s32.totalorder %s150, %s153
      %p159 = scmp.eq.s32.totalorder %s11, 0
      %p160 = por %p158, %p159
      %p161 = scmp.ne.s32.totalorder %s150, %s153
      %p162 = scmp.eq.s32.totalorder %s16, 1
      %p163 = por %p161, %p162
      %p164 = scmp.ne.s32.totalorder %s153, %s154
      %p165 = scmp.eq.s32.totalorder %s16, 0
      %p166 = por %p164, %p165
      %p167 = scmp.ne.s32.totalorder %s153, %s154
      %p168 = scmp.eq.s32.totalorder %s17, 1
      %p169 = por %p167, %p168
      %p171 = scmp.ne.s32.totalorder %s154, %s170
      %p172 = scmp.eq.s32.totalorder %s17, 0
      %p173 = por %p171, %p172
      %p174 = scmp.le.s32.totalorder 1, %s11
      %p175 = scmp.lt.s32.totalorder %s11, 3
      %p176 = pnand %p174, %p175
      %p177 = pneg %p176
      // Predicated region
      $region9: #{dense_mlp_net_forward.1} parent=5 // pred_check
        _
      $region10: #{dense_mlp_net_forward.1} parent=5 // pred_check_branch
        %179 = sbr.rel (%p176) target = $region12
      $region11: #{dense_mlp_net_forward.1} parent=5 // pred_region
        %s180 = ssub.s32 %s11, 1
        // Predicated region
        $region13: #{dense_mlp_net_forward.1} parent=11 // pred_check
          %p181 = pneg %p77
        $region14: #{dense_mlp_net_forward.1} parent=11 // pred_check_branch
          %183 = sbr.rel (%p181) target = $region16
        $region15: #{dense_mlp_net_forward.1} parent=11 // pred_region
          %p184 = scmp.lt.s32.totalorder %s20, 0
          %s185 = scalar_select %p184, %s20, 0
          %s186 = smul.addr %s185, 2
          %s187 = scalar_lea.vmem %s1, %s186
        $region16: #{dense_mlp_net_forward.1} parent=11 // pred_fallthru
          _
        // Predicated region
        $region17: #{dense_mlp_net_forward.1} parent=11 // pred_check
          %p188 = pneg %p98
        $region18: #{dense_mlp_net_forward.1} parent=11 // pred_check_branch
          %190 = sbr.rel (%p188) target = $region20
        $region19: #{dense_mlp_net_forward.1} parent=11 // pred_region
          _
        $region20: #{dense_mlp_net_forward.1} parent=11 // pred_fallthru
          _
        // Predicated region
        $region21: #{dense_mlp_net_forward.1} parent=11 // pred_check
          %p191 = pneg %p119
        $region22: #{dense_mlp_net_forward.1} parent=11 // pred_check_branch
          %193 = sbr.rel (%p191) target = $region24
        $region23: #{dense_mlp_net_forward.1} parent=11 // pred_region
          _
        $region24: #{dense_mlp_net_forward.1} parent=11 // pred_fallthru
          _
        // Predicated region
        $region25: #{dense_mlp_net_forward.1} parent=11 // pred_check
          %p194 = pneg %p140
        $region26: #{dense_mlp_net_forward.1} parent=11 // pred_check_branch
          %196 = sbr.rel (%p194) target = $region28
        $region27: #{dense_mlp_net_forward.1} parent=11 // pred_region
          _
        $region28: #{dense_mlp_net_forward.1} parent=11 // pred_fallthru
          _
      $region12: #{dense_mlp_net_forward.1} parent=5 // pred_fallthru
        _
      %p197 = scmp.lt.s32.totalorder %s11, 2
      // Predicated region
      $region29: #{dense_mlp_net_forward.1} parent=5 // pred_check
        %p198 = pneg %p197
      $region30: #{dense_mlp_net_forward.1} parent=5 // pred_check_branch
        %200 = sbr.rel (%p198) target = $region32
      $region31: #{dense_mlp_net_forward.1} parent=5 // pred_region
        // Predicated region
        $region33: #{dense_mlp_net_forward.1} parent=31 // pred_check
          %p201 = pneg %p45
        $region34: #{dense_mlp_net_forward.1} parent=31 // pred_check_branch
          %203 = sbr.rel (%p201) target = $region36
        $region35: #{dense_mlp_net_forward.1} parent=31 // pred_region
          %s204 = sand.u32 %s35, 1
          %s205 = sand.u32 %s35, 1
          %s206 = smul.addr %s205, 64
          %s207 = scalar_lea.vmem [#allocation3], %s206
          %s208 = smul.u32 2, %s18
          %s209 = smul.u32 4, %s19
          %s210 = smul.addr %s209, 2
          %s211 = smul.addr %s208, 16
          %s212 = sadd.s32 %s210, %s211
          %s213 = smul.addr %s212, 4
          %s214 = scalar_lea.vmem %s0, %s213
          // Predicated region
          $region37: #{dense_mlp_net_forward.1} parent=35 // pred_check
            _
          $region38: #{dense_mlp_net_forward.1} parent=35 // pred_check_branch
            %216 = sbr.rel (0) target = $region40
          $region39: #{dense_mlp_net_forward.1} parent=35 // pred_region
            // Predicated region
            $region41: #{dense_mlp_net_forward.1} parent=39 // pred_check
              _
            $region42: #{dense_mlp_net_forward.1} parent=39 // pred_check_branch
              %218 = sbr.rel (0) target = $region44
            $region43: #{dense_mlp_net_forward.1} parent=39 // pred_region
              // Predicated region
              $region56: #{dense_mlp_net_forward.1} parent=43 // pred_check
                _
              $region57: #{dense_mlp_net_forward.1} parent=43 // pred_check_branch
                %248 = sbr.rel (0) target = $region59
              $region58: #{dense_mlp_net_forward.1} parent=43 // pred_region
                loop: start=0, step=1, limit=1
                $region60: #{dense_mlp_net_forward.1} parent=58 // loop_pre_header
                  _
                $region61: #{dense_mlp_net_forward.1} parent=58 // loop_header
                  %s250 = sphi 0, %s254
                  %p251 = scmp.ge.s32.totalorder %s250, 1
                  %s255 = sphi %s214, %s214
                  %s256 = sphi %s207, %s207
                $region62: #{dense_mlp_net_forward.1} parent=58 // loop_header_branch
                  %253 = sbr.rel (%p251) target = $region66
                $region63: #{dense_mlp_net_forward.1} parent=58 // loop_body
                  %v257 = vld [vmem:[%s255] sm:$0xff]
                  %258 = vst [vmem:[%s256] sm:$0xff] %v257
                  %v259 = vld [vmem:[%s255 + $0x8] sm:$0xff]
                  %260 = vst [vmem:[%s256 + $0x8] sm:$0xff] %v259
                  %v261 = vld [vmem:[%s255 + $0x10] sm:$0xff]
                  %262 = vst [vmem:[%s256 + $0x10] sm:$0xff] %v261
                  %v263 = vld [vmem:[%s255 + $0x18] sm:$0xff]
                  %264 = vst [vmem:[%s256 + $0x18] sm:$0xff] %v263
                  %v265 = vld [vmem:[%s255 + $0x40] sm:$0xff]
                  %266 = vst [vmem:[%s256 + $0x20] sm:$0xff] %v265
                  %v267 = vld [vmem:[%s255 + $0x48] sm:$0xff]
                  %268 = vst [vmem:[%s256 + $0x28] sm:$0xff] %v267
                  %v269 = vld [vmem:[%s255 + $0x50] sm:$0xff]
                  %270 = vst [vmem:[%s256 + $0x30] sm:$0xff] %v269
                  %v271 = vld [vmem:[%s255 + $0x58] sm:$0xff]
                  %272 = vst [vmem:[%s256 + $0x38] sm:$0xff] %v271
                $region64: #{dense_mlp_net_forward.1} parent=58 // loop_footer
                  %s254 = sadd.s32 1, %s250
                $region65: #{dense_mlp_net_forward.1} parent=58 // loop_footer_branch
                  %249 = sbr.rel target = $region61
                $region66: #{dense_mlp_net_forward.1} parent=58 // loop_exit
                  _
              $region59: #{dense_mlp_net_forward.1} parent=43 // pred_fallthru
                _
              // Predicated region
              $region67: #{dense_mlp_net_forward.1} parent=43 // pred_check
                _
              $region68: #{dense_mlp_net_forward.1} parent=43 // pred_check_branch
                %274 = sbr.rel target = $region70
              $region69: #{dense_mlp_net_forward.1} parent=43 // pred_region
                _
              $region70: #{dense_mlp_net_forward.1} parent=43 // pred_fallthru
                _
            $region44: #{dense_mlp_net_forward.1} parent=39 // pred_fallthru
              _
            // Predicated region
            $region45: #{dense_mlp_net_forward.1} parent=39 // pred_check
              _
            $region46: #{dense_mlp_net_forward.1} parent=39 // pred_check_branch
              %220 = sbr.rel target = $region48
            $region47: #{dense_mlp_net_forward.1} parent=39 // pred_region
              %s222 = ssub.s32 256, 1
              loop: start=0, step=1, limit=1
              $region49: #{dense_mlp_net_forward.1} parent=47 // loop_pre_header
                _
              $region50: #{dense_mlp_net_forward.1} parent=47 // loop_header
                %s224 = sphi 0, %s228
                %p225 = scmp.ge.s32.totalorder %s224, 1
                %s229 = sphi %s214, %s214
                %s230 = sphi %s207, %s207
              $region51: #{dense_mlp_net_forward.1} parent=47 // loop_header_branch
                %227 = sbr.rel (%p225) target = $region55
              $region52: #{dense_mlp_net_forward.1} parent=47 // loop_body
                %v231 = vld [vmem:[%s229] sm:%s222]
                %232 = vst [vmem:[%s230] sm:%s222] %v231
                %v233 = vld [vmem:[%s229 + $0x8] sm:%s222]
                %234 = vst [vmem:[%s230 + $0x8] sm:%s222] %v233
                %v235 = vld [vmem:[%s229 + $0x10] sm:%s222]
                %236 = vst [vmem:[%s230 + $0x10] sm:%s222] %v235
                %v237 = vld [vmem:[%s229 + $0x18] sm:%s222]
                %238 = vst [vmem:[%s230 + $0x18] sm:%s222] %v237
                %v239 = vld [vmem:[%s229 + $0x40] sm:%s222]
                %240 = vst [vmem:[%s230 + $0x20] sm:%s222] %v239
                %v241 = vld [vmem:[%s229 + $0x48] sm:%s222]
                %242 = vst [vmem:[%s230 + $0x28] sm:%s222] %v241
                %v243 = vld [vmem:[%s229 + $0x50] sm:%s222]
                %244 = vst [vmem:[%s230 + $0x30] sm:%s222] %v243
                %v245 = vld [vmem:[%s229 + $0x58] sm:%s222]
                %246 = vst [vmem:[%s230 + $0x38] sm:%s222] %v245
              $region53: #{dense_mlp_net_forward.1} parent=47 // loop_footer
                %s228 = sadd.s32 1, %s224
              $region54: #{dense_mlp_net_forward.1} parent=47 // loop_footer_branch
                %223 = sbr.rel target = $region50
              $region55: #{dense_mlp_net_forward.1} parent=47 // loop_exit
                _
            $region48: #{dense_mlp_net_forward.1} parent=39 // pred_fallthru
              _
          $region40: #{dense_mlp_net_forward.1} parent=35 // pred_fallthru
            _
          %275 = vnop
        $region36: #{dense_mlp_net_forward.1} parent=31 // pred_fallthru
          _
      $region32: #{dense_mlp_net_forward.1} parent=5 // pred_fallthru
        _
      %p276 = scmp.le.s32.totalorder 1, %s11
      %p277 = scmp.lt.s32.totalorder %s11, 3
      %p278 = pnand %p276, %p277
      %p279 = pneg %p278
      // Predicated region
      $region71: #{dense_mlp_net_forward.1} parent=5 // pred_check
        _
      $region72: #{dense_mlp_net_forward.1} parent=5 // pred_check_branch
        %281 = sbr.rel (%p278) target = $region74
      $region73: #{dense_mlp_net_forward.1} parent=5 // pred_region
        %s282 = ssub.s32 %s11, 1
        %s283 = sand.u32 %s38, 1
        %s284 = sand.u32 %s38, 1
        %s285 = smul.addr %s284, 64
        %s286 = scalar_lea.vmem [#allocation3], %s285
        // Predicated region
        $region75: #{dense_mlp_net_forward.1} parent=73 // pred_check
          %p287 = pneg %p51
        $region76: #{dense_mlp_net_forward.1} parent=73 // pred_check_branch
          %289 = sbr.rel (%p287) target = $region78
        $region77: #{dense_mlp_net_forward.1} parent=73 // pred_region
          _
        $region78: #{dense_mlp_net_forward.1} parent=73 // pred_fallthru
          _
        %s290 = sand.u32 %s38, 1
        %s291 = sand.u32 %s38, 1
        %s292 = smul.addr %s291, 64
        %s293 = scalar_lea.vmem [#allocation3], %s292
        %p294 = pneg %p51
        %p295 = pneg %p48
        %p296 = scmp.lt.s32.totalorder %s20, 0
        %s297 = scalar_select %p296, %s20, 0
        %s298 = smul.addr %s297, 2
        %s299 = scalar_lea.vmem %s1, %s298
        %p300 = pneg %p77
        %p301 = pneg %p74
        %p302 = pneg %p98
        %p303 = pneg %p95
        %p304 = pneg %p119
        %p305 = pneg %p116
        %p306 = pneg %p140
        %p307 = pneg %p137
        %p308 = pneg %p166
        %p309 = pneg %p163
        %p310 = scmp.lt.s32.totalorder %s20, 0
        %s311 = scalar_select %p310, %s20, 0
        %s312 = smul.addr %s311, 2
        %s313 = scalar_lea.vmem %s5, %s312
        %s314 = smul.u32 2, %s20
        %s315 = smul.u32 4, %s21
        %p316 = scmp.lt.s32.totalorder %s20, 0
        %s317 = scalar_select %p316, %s20, 0
        %s318 = smul.addr %s317, 2
        %s319 = scalar_lea.vmem %s1, %s318
        %p320 = scmp.lt.s32.totalorder %s20, 0
        %s321 = scalar_select %p320, %s20, 0
        %s322 = smul.addr %s321, 2
        %s323 = scalar_lea.vmem %s5, %s322
        %v324 = vld [vmem:[%s4] sm:$0xff]
        %p325 = scmp.eq.s32.totalorder %s21, 0
        // Predicated region
        $region79: #{dense_mlp_net_forward.1} parent=73 // pred_check
          %p326 = pneg %p325
        $region80: #{dense_mlp_net_forward.1} parent=73 // pred_check_branch
          %328 = sbr.rel (%p326) target = $region82
        $region81: #{dense_mlp_net_forward.1} parent=73 // pred_region
          %329 = vst [vmem:[#allocation2] sm:$0x3] 0.0
        $region82: #{dense_mlp_net_forward.1} parent=73 // pred_fallthru
          _
        %v330 = vld [vmem:[%s286] sm:$0xff]
        %v331 = vld [vmem:[%s286 + $0x8] sm:$0xff]
        %v332 = vld [vmem:[%s286 + $0x10] sm:$0xff]
        %v333 = vld [vmem:[%s286 + $0x18] sm:$0xff]
        %v334 = vld [vmem:[%s286 + $0x20] sm:$0xff]
        %v335 = vld [vmem:[%s286 + $0x28] sm:$0xff]
        %v336 = vld [vmem:[%s286 + $0x30] sm:$0xff]
        %v337 = vld [vmem:[%s286 + $0x38] sm:$0xff]
        %v338 = vld [vmem:[%s2] sm:$0xf]
        %v339 = vld [vmem:[%s2 + $0x4] sm:$0xf]
        %v340 = vld [vmem:[%s2 + $0x8] sm:$0xf]
        %v341 = vld [vmem:[%s2 + $0xc] sm:$0xf]
        %v342 = vld [vmem:[%s2 + $0x10] sm:$0xf]
        %v343 = vld [vmem:[%s2 + $0x14] sm:$0xf]
        %v344 = vld [vmem:[%s2 + $0x18] sm:$0xf]
        %v345 = vld [vmem:[%s2 + $0x1c] sm:$0xf]
        %v346 = vld [vmem:[%s2 + $0x20] sm:$0xf]
        %v347 = vld [vmem:[%s2 + $0x24] sm:$0xf]
        %v348 = vld [vmem:[%s2 + $0x28] sm:$0xf]
        %v349 = vld [vmem:[%s2 + $0x2c] sm:$0xf]
        %v350 = vld [vmem:[%s2 + $0x30] sm:$0xf]
        %v351 = vld [vmem:[%s2 + $0x34] sm:$0xf]
        %v352 = vld [vmem:[%s2 + $0x38] sm:$0xf]
        %v353 = vld [vmem:[%s2 + $0x3c] sm:$0xf]
        %v354 = vld [vmem:[%s2 + $0x40] sm:$0xf]
        %v355 = vld [vmem:[%s2 + $0x44] sm:$0xf]
        %v356 = vld [vmem:[%s2 + $0x48] sm:$0xf]
        %v357 = vld [vmem:[%s2 + $0x4c] sm:$0xf]
        %v358 = vld [vmem:[%s2 + $0x50] sm:$0xf]
        %v359 = vld [vmem:[%s2 + $0x54] sm:$0xf]
        %v360 = vld [vmem:[%s2 + $0x58] sm:$0xf]
        %v361 = vld [vmem:[%s2 + $0x5c] sm:$0xf]
        %v362 = vld [vmem:[%s2 + $0x60] sm:$0xf]
        %v363 = vld [vmem:[%s2 + $0x64] sm:$0xf]
        %v364 = vld [vmem:[%s2 + $0x68] sm:$0xf]
        %v365 = vld [vmem:[%s2 + $0x6c] sm:$0xf]
        %v366 = vld [vmem:[%s2 + $0x70] sm:$0xf]
        %v367 = vld [vmem:[%s2 + $0x74] sm:$0xf]
        %v368 = vld [vmem:[%s2 + $0x78] sm:$0xf]
        %v369 = vld [vmem:[%s2 + $0x7c] sm:$0xf]
        %v370 = vperm.slane %v324, 6
        %v379 = vunpack.c.l.b16 %v330
        %v380 = vunpack.c.h.b16 %v330
        %v381 = vunpack.c.l.b16 %v331
        %v382 = vunpack.c.h.b16 %v331
        %v383 = vunpack.c.l.b16 %v332
        %v384 = vunpack.c.h.b16 %v332
        %v385 = vunpack.c.l.b16 %v333
        %v386 = vunpack.c.h.b16 %v333
        %v387 = vunpack.c.l.b16 %v334
        %v388 = vunpack.c.h.b16 %v334
        %v389 = vunpack.c.l.b16 %v335
        %v390 = vunpack.c.h.b16 %v335
        %v391 = vunpack.c.l.b16 %v336
        %v392 = vunpack.c.h.b16 %v336
        %v393 = vunpack.c.l.b16 %v337
        %v394 = vunpack.c.h.b16 %v337
        %v395 = vpack.c.b16 %v381, %v379
        %v396 = vpack.c.b16 %v382, %v380
        %v397 = vpack.c.b16 %v385, %v383
        %v398 = vpack.c.b16 %v386, %v384
        %v399 = vpack.c.b16 %v389, %v387
        %v400 = vpack.c.b16 %v390, %v388
        %v401 = vpack.c.b16 %v393, %v391
        %v402 = vpack.c.b16 %v394, %v392
        %v443 = vunpack.c.l.b16 %v338
        %v444 = vunpack.c.l.b16 %v339
        %v445 = vunpack.c.l.b16 %v340
        %v446 = vunpack.c.l.b16 %v341
        %v447 = vunpack.c.l.b16 %v342
        %v448 = vunpack.c.l.b16 %v343
        %v449 = vunpack.c.l.b16 %v344
        %v450 = vunpack.c.l.b16 %v345
        %v451 = vunpack.c.l.b16 %v346
        %v452 = vunpack.c.l.b16 %v347
        %v453 = vunpack.c.l.b16 %v348
        %v454 = vunpack.c.l.b16 %v349
        %v455 = vunpack.c.l.b16 %v350
        %v456 = vunpack.c.l.b16 %v351
        %v457 = vunpack.c.l.b16 %v352
        %v458 = vunpack.c.l.b16 %v353
        %v459 = vunpack.c.l.b16 %v354
        %v460 = vunpack.c.l.b16 %v355
        %v461 = vunpack.c.l.b16 %v356
        %v462 = vunpack.c.l.b16 %v357
        %v463 = vunpack.c.l.b16 %v358
        %v464 = vunpack.c.l.b16 %v359
        %v465 = vunpack.c.l.b16 %v360
        %v466 = vunpack.c.l.b16 %v361
        %v467 = vunpack.c.l.b16 %v362
        %v468 = vunpack.c.l.b16 %v363
        %v469 = vunpack.c.l.b16 %v364
        %v470 = vunpack.c.l.b16 %v365
        %v471 = vunpack.c.l.b16 %v366
        %v472 = vunpack.c.l.b16 %v367
        %v473 = vunpack.c.l.b16 %v368
        %v474 = vunpack.c.l.b16 %v369
        %v475 = vpack.c.b16 %v444, %v443
        %v476 = vpack.c.b16 %v446, %v445
        %v477 = vpack.c.b16 %v448, %v447
        %v478 = vpack.c.b16 %v450, %v449
        %v479 = vpack.c.b16 %v452, %v451
        %v480 = vpack.c.b16 %v454, %v453
        %v481 = vpack.c.b16 %v456, %v455
        %v482 = vpack.c.b16 %v458, %v457
        %v483 = vpack.c.b16 %v460, %v459
        %v484 = vpack.c.b16 %v462, %v461
        %v485 = vpack.c.b16 %v464, %v463
        %v486 = vpack.c.b16 %v466, %v465
        %v487 = vpack.c.b16 %v468, %v467
        %v488 = vpack.c.b16 %v470, %v469
        %v489 = vpack.c.b16 %v472, %v471
        %v490 = vpack.c.b16 %v474, %v473
        %507 = vmatpush.bf16.msra.mxu0 %v482
        %508 = vmatpush.bf16.msra.mxu0 %v481
        %509 = vmatpush.bf16.msra.mxu0 %v480
        %510 = vmatpush.bf16.msra.mxu0 %v479
        %511 = vmatpush.bf16.msra.mxu0 %v478
        %512 = vmatpush.bf16.msra.mxu0 %v477
        %513 = vmatpush.bf16.msra.mxu0 %v476
        %514 = vmatpush.bf16.msra.mxu0 %v475
        %515 = vmatmul.bf16.gmra.mxu0 %v395
        %v516 = vpop.f32.mrf.mxu0
        %v517 = vadd.f32 %v370, %v516
        %v518 = vpop.f32.mrf.mxu0
        %v519 = vadd.f32 %v370, %v518
        %520 = vmatmul.bf16.gmra.mxu0 %v397
        %v521 = vpop.f32.mrf.mxu0
        %v522 = vadd.f32 %v370, %v521
        %v523 = vpop.f32.mrf.mxu0
        %v524 = vadd.f32 %v370, %v523
        %525 = vmatmul.bf16.gmra.mxu0 %v399
        %v526 = vpop.f32.mrf.mxu0
        %v527 = vadd.f32 %v370, %v526
        %v528 = vpop.f32.mrf.mxu0
        %v529 = vadd.f32 %v370, %v528
        %530 = vmatmul.bf16.gmra.mxu0 %v401
        %v531 = vpop.f32.mrf.mxu0
        %v532 = vadd.f32 %v370, %v531
        %v533 = vpop.f32.mrf.mxu0
        %v534 = vadd.f32 %v370, %v533
        %535 = vdwg.mxu0
        %536 = vmatpush.bf16.msra.mxu0 %v490
        %537 = vmatpush.bf16.msra.mxu0 %v489
        %538 = vmatpush.bf16.msra.mxu0 %v488
        %539 = vmatpush.bf16.msra.mxu0 %v487
        %540 = vmatpush.bf16.msra.mxu0 %v486
        %541 = vmatpush.bf16.msra.mxu0 %v485
        %542 = vmatpush.bf16.msra.mxu0 %v484
        %543 = vmatpush.bf16.msra.mxu0 %v483
        %544 = vmatmul.bf16.gmra.mxu0 %v396
        %v545 = vpop.f32.mrf.mxu0
        %v546 = vadd.f32 %v517, %v545
        %v547 = vpop.f32.mrf.mxu0
        %v548 = vadd.f32 %v519, %v547
        %549 = vmatmul.bf16.gmra.mxu0 %v398
        %v550 = vpop.f32.mrf.mxu0
        %v551 = vadd.f32 %v522, %v550
        %v552 = vpop.f32.mrf.mxu0
        %v553 = vadd.f32 %v524, %v552
        %554 = vmatmul.bf16.gmra.mxu0 %v400
        %v555 = vpop.f32.mrf.mxu0
        %v556 = vadd.f32 %v527, %v555
        %v557 = vpop.f32.mrf.mxu0
        %v558 = vadd.f32 %v529, %v557
        %559 = vmatmul.bf16.gmra.mxu0 %v402
        %v560 = vpop.f32.mrf.mxu0
        %v561 = vadd.f32 %v532, %v560
        %v562 = vpop.f32.mrf.mxu0
        %v563 = vadd.f32 %v534, %v562
        %564 = vdwg.mxu0
        %v565 = vmax.f32 %v546, 0.0
        %v566 = vmax.f32 %v548, 0.0
        %v567 = vmax.f32 %v551, 0.0
        %v568 = vmax.f32 %v553, 0.0
        %v569 = vmax.f32 %v556, 0.0
        %v570 = vmax.f32 %v558, 0.0
        %v571 = vmax.f32 %v561, 0.0
        %v572 = vmax.f32 %v563, 0.0
        %v573 = vld [vmem:[#allocation2] sm:$0x3]
        %v574 = vadd.f32 %v565, %v566
        %v575 = vadd.f32 %v574, %v567
        %v576 = vadd.f32 %v575, %v568
        %v577 = vrot.slane %v576, 4
        %v578 = vadd.f32 %v576, %v577
        %v579 = vrot.slane %v578, 2
        %v580 = vadd.f32 %v578, %v579
        %v581 = vrot.slane %v580, 1
        %v582 = vadd.f32 %v580, %v581
        %v583 = vadd.f32 %v569, %v570
        %v584 = vadd.f32 %v583, %v571
        %v585 = vadd.f32 %v584, %v572
        %v586 = vrot.slane %v585, 4
        %v587 = vadd.f32 %v585, %v586
        %v588 = vrot.slane %v587, 2
        %v589 = vadd.f32 %v587, %v588
        %v590 = vrot.slane %v589, 1
        %v591 = vadd.f32 %v589, %v590
        %vm594 = vcmask 1041409
        %v595 = vsel %vm594, %v591, %v582
        %v597 = vadd.f32 %v573, %v595
        %598 = vst [vmem:[#allocation2] sm:$0x3] %v597
        %p599 = scmp.eq.s32.totalorder %s21, 1
        // Predicated region
        $region83: #{dense_mlp_net_forward.1} parent=73 // pred_check
          %p600 = pneg %p599
        $region84: #{dense_mlp_net_forward.1} parent=73 // pred_check_branch
          %602 = sbr.rel (%p600) target = $region86
        $region85: #{dense_mlp_net_forward.1} parent=73 // pred_region
          %v603 = vld [vmem:[#allocation2] sm:$0x3]
          %v604 = vmul.f32 %v603, 0.015625
          %v605 = vld [vmem:[%s3] sm:$0xff]
          %v606 = vld [vmem:[%s3 + $0x8] sm:$0xff]
          %v607 = vld [vmem:[%s3 + $0x10] sm:$0xff]
          %v608 = vld [vmem:[%s3 + $0x18] sm:$0xff]
          %v609 = vld [vmem:[%s3 + $0x20] sm:$0xff]
          %v610 = vld [vmem:[%s3 + $0x28] sm:$0xff]
          %v611 = vld [vmem:[%s3 + $0x30] sm:$0xff]
          %v612 = vld [vmem:[%s3 + $0x38] sm:$0xff]
          %v613 = vld [vmem:[%s3 + $0x40] sm:$0xff]
          %v614 = vld [vmem:[%s3 + $0x48] sm:$0xff]
          %v615 = vld [vmem:[%s3 + $0x50] sm:$0xff]
          %v616 = vld [vmem:[%s3 + $0x58] sm:$0xff]
          %v617 = vld [vmem:[%s3 + $0x60] sm:$0xff]
          %v618 = vld [vmem:[%s3 + $0x68] sm:$0xff]
          %v619 = vld [vmem:[%s3 + $0x70] sm:$0xff]
          %v620 = vld [vmem:[%s3 + $0x78] sm:$0xff]
          %v621 = vperm.slane %v324, 0
          %622 = vmatpush.msra.mxu0 %v620
          %623 = vmatpush.msra.mxu0 %v619
          %624 = vmatpush.msra.mxu0 %v618
          %625 = vmatpush.msra.mxu0 %v617
          %626 = vmatpush.msra.mxu0 %v616
          %627 = vmatpush.msra.mxu0 %v615
          %628 = vmatpush.msra.mxu0 %v614
          %629 = vmatpush.msra.mxu0 %v613
          %630 = vmatpush.msra.mxu0 %v612
          %631 = vmatpush.msra.mxu0 %v611
          %632 = vmatpush.msra.mxu0 %v610
          %633 = vmatpush.msra.mxu0 %v609
          %634 = vmatpush.msra.mxu0 %v608
          %635 = vmatpush.msra.mxu0 %v607
          %636 = vmatpush.msra.mxu0 %v606
          %637 = vmatpush.msra.mxu0 %v605
          %638 = vmatmul.f32.gmra.mxu0 %v604
          %v639 = vpop.f32.mrf.mxu0
          %v640 = vadd.f32 %v621, %v639
          %641 = vdwg.mxu0
          %v642 = vld [vmem:[%s319] sm:$0x3]
          %s643 = scalar_lea.vmem %s3, 128
          %v644 = vld [vmem:[%s643] sm:$0xff]
          %v645 = vld [vmem:[%s643 + $0x8] sm:$0xff]
          %v646 = vld [vmem:[%s643 + $0x10] sm:$0xff]
          %v647 = vld [vmem:[%s643 + $0x18] sm:$0xff]
          %v648 = vld [vmem:[%s643 + $0x20] sm:$0xff]
          %v649 = vld [vmem:[%s643 + $0x28] sm:$0xff]
          %v650 = vld [vmem:[%s643 + $0x30] sm:$0xff]
          %v651 = vld [vmem:[%s643 + $0x38] sm:$0xff]
          %v652 = vld [vmem:[%s643 + $0x40] sm:$0xff]
          %v653 = vld [vmem:[%s643 + $0x48] sm:$0xff]
          %v654 = vld [vmem:[%s643 + $0x50] sm:$0xff]
          %v655 = vld [vmem:[%s643 + $0x58] sm:$0xff]
          %v656 = vld [vmem:[%s643 + $0x60] sm:$0xff]
          %v657 = vld [vmem:[%s643 + $0x68] sm:$0xff]
          %v658 = vld [vmem:[%s643 + $0x70] sm:$0xff]
          %v659 = vld [vmem:[%s643 + $0x78] sm:$0xff]
          %v660 = vperm.slane %v324, 1
          %661 = vmatpush.msra.mxu0 %v659
          %662 = vmatpush.msra.mxu0 %v658
          %663 = vmatpush.msra.mxu0 %v657
          %664 = vmatpush.msra.mxu0 %v656
          %665 = vmatpush.msra.mxu0 %v655
          %666 = vmatpush.msra.mxu0 %v654
          %667 = vmatpush.msra.mxu0 %v653
          %668 = vmatpush.msra.mxu0 %v652
          %669 = vmatpush.msra.mxu0 %v651
          %670 = vmatpush.msra.mxu0 %v650
          %671 = vmatpush.msra.mxu0 %v649
          %672 = vmatpush.msra.mxu0 %v648
          %673 = vmatpush.msra.mxu0 %v647
          %674 = vmatpush.msra.mxu0 %v646
          %675 = vmatpush.msra.mxu0 %v645
          %676 = vmatpush.msra.mxu0 %v644
          %677 = vmatmul.f32.gmra.mxu0 %v642
          %v678 = vpop.f32.mrf.mxu0
          %v679 = vadd.f32 %v660, %v678
          %680 = vdwg.mxu0
          %v681 = vmul.f32 %v679, 0.5
          %v682 = vmul.f32 %v679, 0.044715
          %v683 = vmul.f32 %v682, %v679
          %v684 = vmul.f32 %v683, %v679
          %v685 = vadd.f32 %v679, %v684
          %v686 = vmul.f32 %v685, 0.7978846
          %v687 = vtanh.pop %v686
          %v688 = vadd.f32 %v687, 1.0
          %v689 = vmul.f32 %v681, %v688
          %s690 = scalar_lea.vmem %s3, 256
          %v691 = vld [vmem:[%s690] sm:$0xff]
          %v692 = vld [vmem:[%s690 + $0x8] sm:$0xff]
          %v693 = vld [vmem:[%s690 + $0x10] sm:$0xff]
          %v694 = vld [vmem:[%s690 + $0x18] sm:$0xff]
          %v695 = vld [vmem:[%s690 + $0x20] sm:$0xff]
          %v696 = vld [vmem:[%s690 + $0x28] sm:$0xff]
          %v697 = vld [vmem:[%s690 + $0x30] sm:$0xff]
          %v698 = vld [vmem:[%s690 + $0x38] sm:$0xff]
          %v699 = vld [vmem:[%s690 + $0x40] sm:$0xff]
          %v700 = vld [vmem:[%s690 + $0x48] sm:$0xff]
          %v701 = vld [vmem:[%s690 + $0x50] sm:$0xff]
          %v702 = vld [vmem:[%s690 + $0x58] sm:$0xff]
          %v703 = vld [vmem:[%s690 + $0x60] sm:$0xff]
          %v704 = vld [vmem:[%s690 + $0x68] sm:$0xff]
          %v705 = vld [vmem:[%s690 + $0x70] sm:$0xff]
          %v706 = vld [vmem:[%s690 + $0x78] sm:$0xff]
          %v707 = vperm.slane %v324, 2
          %708 = vmatpush.msra.mxu0 %v706
          %709 = vmatpush.msra.mxu0 %v705
          %710 = vmatpush.msra.mxu0 %v704
          %711 = vmatpush.msra.mxu0 %v703
          %712 = vmatpush.msra.mxu0 %v702
          %713 = vmatpush.msra.mxu0 %v701
          %714 = vmatpush.msra.mxu0 %v700
          %715 = vmatpush.msra.mxu0 %v699
          %716 = vmatpush.msra.mxu0 %v698
          %717 = vmatpush.msra.mxu0 %v697
          %718 = vmatpush.msra.mxu0 %v696
          %719 = vmatpush.msra.mxu0 %v695
          %720 = vmatpush.msra.mxu0 %v694
          %721 = vmatpush.msra.mxu0 %v693
          %722 = vmatpush.msra.mxu0 %v692
          %723 = vmatpush.msra.mxu0 %v691
          %724 = vmatmul.f32.gmra.mxu0 %v689
          %v725 = vpop.f32.mrf.mxu0
          %v726 = vadd.f32 %v707, %v725
          %727 = vdwg.mxu0
          %v728 = vtanh.pop %v726
          %v729 = vadd.f32 %v640, %v728
          %s730 = scalar_lea.vmem %s3, 384
          %v731 = vld [vmem:[%s730] sm:$0xff]
          %v732 = vld [vmem:[%s730 + $0x8] sm:$0xff]
          %v733 = vld [vmem:[%s730 + $0x10] sm:$0xff]
          %v734 = vld [vmem:[%s730 + $0x18] sm:$0xff]
          %v735 = vld [vmem:[%s730 + $0x20] sm:$0xff]
          %v736 = vld [vmem:[%s730 + $0x28] sm:$0xff]
          %v737 = vld [vmem:[%s730 + $0x30] sm:$0xff]
          %v738 = vld [vmem:[%s730 + $0x38] sm:$0xff]
          %v739 = vld [vmem:[%s730 + $0x40] sm:$0xff]
          %v740 = vld [vmem:[%s730 + $0x48] sm:$0xff]
          %v741 = vld [vmem:[%s730 + $0x50] sm:$0xff]
          %v742 = vld [vmem:[%s730 + $0x58] sm:$0xff]
          %v743 = vld [vmem:[%s730 + $0x60] sm:$0xff]
          %v744 = vld [vmem:[%s730 + $0x68] sm:$0xff]
          %v745 = vld [vmem:[%s730 + $0x70] sm:$0xff]
          %v746 = vld [vmem:[%s730 + $0x78] sm:$0xff]
          %v747 = vperm.slane %v324, 3
          %748 = vmatpush.msra.mxu0 %v746
          %749 = vmatpush.msra.mxu0 %v745
          %750 = vmatpush.msra.mxu0 %v744
          %751 = vmatpush.msra.mxu0 %v743
          %752 = vmatpush.msra.mxu0 %v742
          %753 = vmatpush.msra.mxu0 %v741
          %754 = vmatpush.msra.mxu0 %v740
          %755 = vmatpush.msra.mxu0 %v739
          %756 = vmatpush.msra.mxu0 %v738
          %757 = vmatpush.msra.mxu0 %v737
          %758 = vmatpush.msra.mxu0 %v736
          %759 = vmatpush.msra.mxu0 %v735
          %760 = vmatpush.msra.mxu0 %v734
          %761 = vmatpush.msra.mxu0 %v733
          %762 = vmatpush.msra.mxu0 %v732
          %763 = vmatpush.msra.mxu0 %v731
          %764 = vmatmul.f32.gmra.mxu0 %v729
          %v765 = vpop.f32.mrf.mxu0
          %v766 = vadd.f32 %v747, %v765
          %767 = vdwg.mxu0
          %v768 = vmul.f32 %v766, 0.5
          %v769 = vmul.f32 %v766, 0.044715
          %v770 = vmul.f32 %v769, %v766
          %v771 = vmul.f32 %v770, %v766
          %v772 = vadd.f32 %v766, %v771
          %v773 = vmul.f32 %v772, 0.7978846
          %v774 = vtanh.pop %v773
          %v775 = vadd.f32 %v774, 1.0
          %v776 = vmul.f32 %v768, %v775
          %s777 = scalar_lea.vmem %s3, 512
          %v778 = vld [vmem:[%s777] sm:$0xff]
          %v779 = vld [vmem:[%s777 + $0x8] sm:$0xff]
          %v780 = vld [vmem:[%s777 + $0x10] sm:$0xff]
          %v781 = vld [vmem:[%s777 + $0x18] sm:$0xff]
          %v782 = vld [vmem:[%s777 + $0x20] sm:$0xff]
          %v783 = vld [vmem:[%s777 + $0x28] sm:$0xff]
          %v784 = vld [vmem:[%s777 + $0x30] sm:$0xff]
          %v785 = vld [vmem:[%s777 + $0x38] sm:$0xff]
          %v786 = vld [vmem:[%s777 + $0x40] sm:$0xff]
          %v787 = vld [vmem:[%s777 + $0x48] sm:$0xff]
          %v788 = vld [vmem:[%s777 + $0x50] sm:$0xff]
          %v789 = vld [vmem:[%s777 + $0x58] sm:$0xff]
          %v790 = vld [vmem:[%s777 + $0x60] sm:$0xff]
          %v791 = vld [vmem:[%s777 + $0x68] sm:$0xff]
          %v792 = vld [vmem:[%s777 + $0x70] sm:$0xff]
          %v793 = vld [vmem:[%s777 + $0x78] sm:$0xff]
          %v794 = vperm.slane %v324, 4
          %795 = vmatpush.msra.mxu0 %v793
          %796 = vmatpush.msra.mxu0 %v792
          %797 = vmatpush.msra.mxu0 %v791
          %798 = vmatpush.msra.mxu0 %v790
          %799 = vmatpush.msra.mxu0 %v789
          %800 = vmatpush.msra.mxu0 %v788
          %801 = vmatpush.msra.mxu0 %v787
          %802 = vmatpush.msra.mxu0 %v786
          %803 = vmatpush.msra.mxu0 %v785
          %804 = vmatpush.msra.mxu0 %v784
          %805 = vmatpush.msra.mxu0 %v783
          %806 = vmatpush.msra.mxu0 %v782
          %807 = vmatpush.msra.mxu0 %v781
          %808 = vmatpush.msra.mxu0 %v780
          %809 = vmatpush.msra.mxu0 %v779
          %810 = vmatpush.msra.mxu0 %v778
          %811 = vmatmul.f32.gmra.mxu0 %v776
          %v812 = vpop.f32.mrf.mxu0
          %v813 = vadd.f32 %v794, %v812
          %814 = vdwg.mxu0
          %s815 = scalar_lea.vmem %s3, 640
          %v816 = vld [vmem:[%s815] sm:$0xff]
          %v817 = vld [vmem:[%s815 + $0x8] sm:$0xff]
          %v818 = vld [vmem:[%s815 + $0x10] sm:$0xff]
          %v819 = vld [vmem:[%s815 + $0x18] sm:$0xff]
          %v820 = vld [vmem:[%s815 + $0x20] sm:$0xff]
          %v821 = vld [vmem:[%s815 + $0x28] sm:$0xff]
          %v822 = vld [vmem:[%s815 + $0x30] sm:$0xff]
          %v823 = vld [vmem:[%s815 + $0x38] sm:$0xff]
          %v824 = vld [vmem:[%s815 + $0x40] sm:$0xff]
          %v825 = vld [vmem:[%s815 + $0x48] sm:$0xff]
          %v826 = vld [vmem:[%s815 + $0x50] sm:$0xff]
          %v827 = vld [vmem:[%s815 + $0x58] sm:$0xff]
          %v828 = vld [vmem:[%s815 + $0x60] sm:$0xff]
          %v829 = vld [vmem:[%s815 + $0x68] sm:$0xff]
          %v830 = vld [vmem:[%s815 + $0x70] sm:$0xff]
          %v831 = vld [vmem:[%s815 + $0x78] sm:$0xff]
          %v832 = vperm.slane %v324, 5
          %833 = vmatpush.msra.mxu0 %v831
          %834 = vmatpush.msra.mxu0 %v830
          %835 = vmatpush.msra.mxu0 %v829
          %836 = vmatpush.msra.mxu0 %v828
          %837 = vmatpush.msra.mxu0 %v827
          %838 = vmatpush.msra.mxu0 %v826
          %839 = vmatpush.msra.mxu0 %v825
          %840 = vmatpush.msra.mxu0 %v824
          %841 = vmatpush.msra.mxu0 %v823
          %842 = vmatpush.msra.mxu0 %v822
          %843 = vmatpush.msra.mxu0 %v821
          %844 = vmatpush.msra.mxu0 %v820
          %845 = vmatpush.msra.mxu0 %v819
          %846 = vmatpush.msra.mxu0 %v818
          %847 = vmatpush.msra.mxu0 %v817
          %848 = vmatpush.msra.mxu0 %v816
          %849 = vmatmul.f32.gmra.mxu0 %v813
          %v850 = vpop.f32.mrf.mxu0
          %v851 = vadd.f32 %v832, %v850
          %852 = vdwg.mxu0
          %v853 = vxor.u32 %v851, 2147483648
          %v854 = vmul.f32 %v853, 1.442695
          %v855 = vpow.pop %v854
          %v856 = vadd.f32 %v855, 1.0
          %v857 = vrcp.pop %v856
          %v858 = vmul.f32 %v856, %v857
          %v859 = vsub.f32 1.0, %v858
          %v860 = vmul.f32 %v857, %v859
          %v861 = vadd.f32 %v857, %v860
          %vm862 = vweird.f32 %v856
          %vm863 = vweird.f32 %v857
          %vm864 = vmor %vm862, %vm863
          %v865 = vsel %vm864, %v857, %v861
          %v866 = vand.u32 2147483647, %v856
          %vm867 = vcmp.eq.f32.partialorder %v866, 8.507059e+37
          %v868 = vand.u32 %v856, 2147483648
          %v869 = vor.u32 1.1754944e-38, %v868
          %v870 = vsel %vm867, %v869, %v865
          %v871 = vmul.f32 1.0, %v870
          %872 = vst [vmem:[%s323] sm:$0x3] %v871
        $region86: #{dense_mlp_net_forward.1} parent=73 // pred_fallthru
          _
        %p873 = scmp.lt.s32.totalorder %s20, 0
        %s874 = scalar_select %p873, %s20, 0
        %s875 = smul.addr %s874, 2
        %s876 = scalar_lea.vmem %s5, %s875
        // Predicated region
        $region87: #{dense_mlp_net_forward.1} parent=73 // pred_check
          %p877 = pneg %p163
        $region88: #{dense_mlp_net_forward.1} parent=73 // pred_check_branch
          %879 = sbr.rel (%p877) target = $region90
        $region89: #{dense_mlp_net_forward.1} parent=73 // pred_region
          _
        $region90: #{dense_mlp_net_forward.1} parent=73 // pred_fallthru
          _
        // Predicated region
        $region91: #{dense_mlp_net_forward.1} parent=73 // pred_check
          %p880 = pneg %p163
        $region92: #{dense_mlp_net_forward.1} parent=73 // pred_check_branch
          %882 = sbr.rel (%p880) target = $region94
        $region93: #{dense_mlp_net_forward.1} parent=73 // pred_region
          %p883 = scmp.lt.s32.totalorder %s20, 0
          %s884 = scalar_select %p883, %s20, 0
          %s885 = smul.addr %s884, 2
          %s886 = scalar_lea.vmem %s5, %s885
        $region94: #{dense_mlp_net_forward.1} parent=73 // pred_fallthru
          _
      $region74: #{dense_mlp_net_forward.1} parent=5 // pred_fallthru
        _
      %p887 = scmp.le.s32.totalorder 2, %s11
      // Predicated region
      $region95: #{dense_mlp_net_forward.1} parent=5 // pred_check
        %p888 = pneg %p887
      $region96: #{dense_mlp_net_forward.1} parent=5 // pred_check_branch
        %890 = sbr.rel (%p888) target = $region98
      $region97: #{dense_mlp_net_forward.1} parent=5 // pred_region
        %s891 = ssub.s32 %s11, 2
      $region98: #{dense_mlp_net_forward.1} parent=5 // pred_fallthru
        _
    $region6: #{dense_mlp_net_forward.1} parent=1 // loop_footer
      %s15 = sadd.s32 1, %s11
    $region7: #{dense_mlp_net_forward.1} parent=1 // loop_footer_branch
      %10 = sbr.rel target = $region3
    $region8: #{dense_mlp_net_forward.1} parent=1 // loop_exit
      _

</llo_original>
